<compile_context>
chip_gen: v7x
topology: tpu7x:2x2x1
jax: 0.10.0
libtpu: 0.0.40
codegen_flags: <defaults>
</compile_context>

<pallas_src>
import math

import jax
import jax.numpy as jnp
from jax.experimental import pallas as pl
from jax.experimental.pallas import tpu as pltpu


def shared_encoder_kernel(
    x_ref,              # [TM, d_model]
    eps_ref,            # [TM, d_model]  pre-generated standard normal noise (f32)
    w1_ref, b1_ref,     # [d_model, d_hidden], [1, d_hidden]
    w2_ref, b2_ref,     # [d_hidden, d_model], [1, d_model]
    wmv_ref, bmv_ref,   # [d_model, 2*d_model], [1, 2*d_model]
    out_ref,            # [TM, 3*d_model]  packed (mu | log_var | z)
):
    d = wmv_ref.shape[0]                       # d_model (static)
    x = x_ref[...]                             # wrapper guarantees float32

    # self.layer: Dropout -> Linear -> Dropout -> Linear  (dropout = identity, eval)
    h = jnp.dot(x, w1_ref[...], preferred_element_type=jnp.float32) + b1_ref[...]
    h = jnp.dot(h, w2_ref[...], preferred_element_type=jnp.float32) + b2_ref[...]

    # self.fc_mu_var: fused matmul producing (mu | log_var) on the lane axis
    mv = jnp.dot(h, wmv_ref[...], preferred_element_type=jnp.float32) + bmv_ref[...]
    mu = mv[:, :d]
    log_var = mv[:, d:]

    # reparameterize: z = mu + eps * exp(0.5 * log_var)
    z = mu + eps_ref[...] * jnp.exp(0.5 * log_var)

    # one lane-dense packed store: (mu | log_var | z)
    out_ref[...] = jnp.concatenate([mv, z], axis=-1)


def _round_up(x, m):
    return ((x + m - 1) // m) * m


def shared_encoder_forward(x, params, eps, *, target_tm=4096):
    """x, eps: [..., d_model]. Returns (mu, log_var, z), each [..., d_model] f32."""
    w1, b1, w2, b2, wmv, bmv = params
    d_model = x.shape[-1]
    d_hidden = w1.shape[-1]
    lead = x.shape[:-1]
    n = math.prod(lead) if lead else 1

    x2 = x.reshape(n, d_model).astype(jnp.float32)
    eps2 = eps.reshape(n, d_model).astype(jnp.float32)

    # Row tile: as large as a ~40 MiB VMEM budget allows (double-buffered x/eps/out
    # tiles plus the [TM, d_hidden] intermediate), capped at target_tm.
    vmem_budget = 40 * 1024 * 1024
    per_row_bytes = 4 * (2 * d_model * 2 + 3 * d_model * 2 + d_hidden)
    tm_cap = max(8, (vmem_budget // per_row_bytes) // 8 * 8)
    tm = int(min(target_tm, tm_cap, _round_up(n, 8)))

    n_pad = _round_up(n, tm)
    if n_pad != n:
        pad = n_pad - n
        x2 = jnp.pad(x2, ((0, pad), (0, 0)))
        eps2 = jnp.pad(eps2, ((0, pad), (0, 0)))

    grid = (pl.cdiv(n_pad, tm),)

    row_spec = pl.BlockSpec((tm, d_model), lambda i: (i, 0))

    def const(shape):
        return pl.BlockSpec(shape, lambda i: (0, 0))

    cost = pl.CostEstimate(
        flops=2 * n_pad * (d_model * d_hidden + d_hidden * d_model
                           + d_model * 2 * d_model) + 3 * n_pad * d_model,
        transcendentals=n_pad * d_model,
        bytes_accessed=4 * (n_pad * d_model * 2 + n_pad * 3 * d_model
                            + d_model * d_hidden + d_hidden
                            + d_hidden * d_model + d_model
                            + d_model * 2 * d_model + 2 * d_model),
    )

    out = pl.pallas_call(
        shared_encoder_kernel,
        out_shape=jax.ShapeDtypeStruct((n_pad, 3 * d_model), jnp.float32),
        grid=grid,
        in_specs=[
            row_spec,                            # x
            row_spec,                            # eps
            const((d_model, d_hidden)),          # w1
            const((1, d_hidden)),                # b1
            const((d_hidden, d_model)),          # w2
            const((1, d_model)),                 # b2
            const((d_model, 2 * d_model)),       # w_mu_var (fused)
            const((1, 2 * d_model)),             # b_mu_var (fused)
        ],
        out_specs=pl.BlockSpec((tm, 3 * d_model), lambda i: (i, 0)),
        compiler_params=pltpu.CompilerParams(
            dimension_semantics=("parallel",),
            vmem_limit_bytes=64 * 1024 * 1024,
        ),
        cost_estimate=cost,
    )(x2, eps2, w1, b1, w2, b2, wmv, bmv)

    out = out[:n]
    mu = out[:, :d_model].reshape(*lead, d_model)
    log_var = out[:, d_model:2 * d_model].reshape(*lead, d_model)
    z = out[:, 2 * d_model:].reshape(*lead, d_model)
    return mu, log_var, z


def init_linear(key, fan_in, fan_out):
    """PyTorch-default-style init; weight stored transposed as [in, out]."""
    kw, kb = jax.random.split(key)
    bound = 1.0 / math.sqrt(fan_in)
    w = jax.random.uniform(kw, (fan_in, fan_out), jnp.float32, -bound, bound)
    b = jax.random.uniform(kb, (1, fan_out), jnp.float32, -bound, bound)
    return w, b


def init_shared_encoder_params(key, d_model, d_hidden):
    k1, k2, k3 = jax.random.split(key, 3)
    w1, b1 = init_linear(k1, d_model, d_hidden)         # Linear(d_model, d_hidden)
    w2, b2 = init_linear(k2, d_hidden, d_model)         # Linear(d_hidden, d_model)
    wmv, bmv = init_linear(k3, d_model, 2 * d_model)    # Linear(d_model, 2*d_model), kept fused
    return (w1, b1, w2, b2, wmv, bmv)


if __name__ == "__main__":
    # Small shapes consistent with the module: d_model=32, d_hidden=64
    batch, seq, d_model, d_hidden = 2, 8, 32, 64

    key = jax.random.PRNGKey(0)
    k_x, k_eps, k_params = jax.random.split(key, 3)

    x = jax.random.normal(k_x, (batch, seq, d_model), dtype=jnp.float32)
    eps = jax.random.normal(k_eps, (batch, seq, d_model), dtype=jnp.float32)
    params = init_shared_encoder_params(k_params, d_model, d_hidden)

    mu, log_var, z = shared_encoder_forward(x, params, eps)
    jax.block_until_ready((mu, log_var, z))

    # Cross-check against a pure-JAX reference of the same math.
    w1, b1, w2, b2, wmv, bmv = params
    h_ref = x.reshape(-1, d_model) @ w1 + b1
    h_ref = h_ref @ w2 + b2
    mv_ref = h_ref @ wmv + bmv
    mu_ref = mv_ref[:, :d_model].reshape(batch, seq, d_model)
    lv_ref = mv_ref[:, d_model:].reshape(batch, seq, d_model)
    z_ref = mu_ref + eps * jnp.exp(0.5 * lv_ref)
    assert jnp.allclose(mu, mu_ref, atol=1e-5)
    assert jnp.allclose(log_var, lv_ref, atol=1e-5)
    assert jnp.allclose(z, z_ref, atol=1e-5)

    print("KERNEL_OK")
</pallas_src>

<mosaic_0001>
module attributes {stable_mosaic.version = 11 : i64} {
  func.func @shared_encoder_kernel(%arg0: i32, %arg1: memref<16x32xf32, #tpu.memory_space<vmem>>, %arg2: memref<16x32xf32, #tpu.memory_space<vmem>>, %arg3: memref<32x64xf32, #tpu.memory_space<vmem>>, %arg4: memref<1x64xf32, #tpu.memory_space<vmem>>, %arg5: memref<64x32xf32, #tpu.memory_space<vmem>>, %arg6: memref<1x32xf32, #tpu.memory_space<vmem>>, %arg7: memref<32x64xf32, #tpu.memory_space<vmem>>, %arg8: memref<1x64xf32, #tpu.memory_space<vmem>>, %arg9: memref<16x96xf32, #tpu.memory_space<vmem>>) attributes {dimension_semantics = [#tpu.dimension_semantics<parallel>], iteration_bounds = array<i64: 1>, scalar_prefetch = 0 : i64, scratch_operands = 0 : i64, tpu.core_type = #tpu.core_type<tc>, window_params = [{transform_indices = @transform_0, window_bounds = array<i64: 16, 32>}, {transform_indices = @transform_1, window_bounds = array<i64: 16, 32>}, {pipeline_mode = #tpu.pipeline_mode<synchronous>, transform_indices = @transform_2, window_bounds = array<i64: 32, 64>}, {pipeline_mode = #tpu.pipeline_mode<synchronous>, transform_indices = @transform_3, window_bounds = array<i64: 1, 64>}, {pipeline_mode = #tpu.pipeline_mode<synchronous>, transform_indices = @transform_4, window_bounds = array<i64: 64, 32>}, {pipeline_mode = #tpu.pipeline_mode<synchronous>, transform_indices = @transform_5, window_bounds = array<i64: 1, 32>}, {pipeline_mode = #tpu.pipeline_mode<synchronous>, transform_indices = @transform_6, window_bounds = array<i64: 32, 64>}, {pipeline_mode = #tpu.pipeline_mode<synchronous>, transform_indices = @transform_7, window_bounds = array<i64: 1, 64>}, {transform_indices = @transform_8, window_bounds = array<i64: 16, 96>}]} {
    %c0 = arith.constant 0 : index
    %c0_0 = arith.constant 0 : index
    %0 = vector.load %arg1[%c0, %c0_0] : memref<16x32xf32, #tpu.memory_space<vmem>>, vector<16x32xf32>
    %c0_1 = arith.constant 0 : index
    %c0_2 = arith.constant 0 : index
    %1 = vector.load %arg3[%c0_1, %c0_2] : memref<32x64xf32, #tpu.memory_space<vmem>>, vector<32x64xf32>
    %cst = arith.constant dense<0.000000e+00> : vector<16x64xf32>
    %2 = tpu.matmul %0, %1, %cst {dimension_numbers = #tpu.dot_dimension_numbers<[1], [0], [0], [1], [0, 0, 1, 1], [], []>} : vector<16x32xf32>, vector<32x64xf32>, vector<16x64xf32> -> vector<16x64xf32>
    %c0_3 = arith.constant 0 : index
    %c0_4 = arith.constant 0 : index
    %3 = vector.load %arg4[%c0_3, %c0_4] : memref<1x64xf32, #tpu.memory_space<vmem>>, vector<1x64xf32>
    %4 = vector.broadcast %3 : vector<1x64xf32> to vector<16x64xf32>
    %5 = arith.addf %2, %4 : vector<16x64xf32>
    %c0_5 = arith.constant 0 : index
    %c0_6 = arith.constant 0 : index
    %6 = vector.load %arg5[%c0_5, %c0_6] : memref<64x32xf32, #tpu.memory_space<vmem>>, vector<64x32xf32>
    %cst_7 = arith.constant dense<0.000000e+00> : vector<16x32xf32>
    %7 = tpu.matmul %5, %6, %cst_7 {dimension_numbers = #tpu.dot_dimension_numbers<[1], [0], [0], [1], [0, 0, 1, 1], [], []>} : vector<16x64xf32>, vector<64x32xf32>, vector<16x32xf32> -> vector<16x32xf32>
    %c0_8 = arith.constant 0 : index
    %c0_9 = arith.constant 0 : index
    %8 = vector.load %arg6[%c0_8, %c0_9] : memref<1x32xf32, #tpu.memory_space<vmem>>, vector<1x32xf32>
    %9 = vector.broadcast %8 : vector<1x32xf32> to vector<16x32xf32>
    %10 = arith.addf %7, %9 : vector<16x32xf32>
    %c0_10 = arith.constant 0 : index
    %c0_11 = arith.constant 0 : index
    %11 = vector.load %arg7[%c0_10, %c0_11] : memref<32x64xf32, #tpu.memory_space<vmem>>, vector<32x64xf32>
    %cst_12 = arith.constant dense<0.000000e+00> : vector<16x64xf32>
    %12 = tpu.matmul %10, %11, %cst_12 {dimension_numbers = #tpu.dot_dimension_numbers<[1], [0], [0], [1], [0, 0, 1, 1], [], []>} : vector<16x32xf32>, vector<32x64xf32>, vector<16x64xf32> -> vector<16x64xf32>
    %c0_13 = arith.constant 0 : index
    %c0_14 = arith.constant 0 : index
    %13 = vector.load %arg8[%c0_13, %c0_14] : memref<1x64xf32, #tpu.memory_space<vmem>>, vector<1x64xf32>
    %14 = vector.broadcast %13 : vector<1x64xf32> to vector<16x64xf32>
    %15 = arith.addf %12, %14 : vector<16x64xf32>
    %16 = vector.extract_strided_slice %15 {offsets = [0, 0], sizes = [16, 32], strides = [1, 1]} : vector<16x64xf32> to vector<16x32xf32>
    %17 = vector.extract_strided_slice %15 {offsets = [0, 32], sizes = [16, 32], strides = [1, 1]} : vector<16x64xf32> to vector<16x32xf32>
    %c0_15 = arith.constant 0 : index
    %c0_16 = arith.constant 0 : index
    %18 = vector.load %arg2[%c0_15, %c0_16] : memref<16x32xf32, #tpu.memory_space<vmem>>, vector<16x32xf32>
    %cst_17 = arith.constant 5.000000e-01 : f32
    %19 = vector.broadcast %cst_17 : f32 to vector<16x32xf32>
    %20 = arith.mulf %19, %17 : vector<16x32xf32>
    %21 = math.exp %20 : vector<16x32xf32>
    %22 = arith.mulf %18, %21 : vector<16x32xf32>
    %23 = arith.addf %16, %22 : vector<16x32xf32>
    %24 = tpu.concatenate %15, %23 in 1 : vector<16x64xf32>, vector<16x32xf32> -> vector<16x96xf32>
    %c0_18 = arith.constant 0 : index
    %c0_19 = arith.constant 0 : index
    %25 = vector.load %arg9[%c0_18, %c0_19] : memref<16x96xf32, #tpu.memory_space<vmem>>, vector<16x96xf32>
    tpu.vector_store %arg9[%c0_18, %c0_19], %24 {strides = array<i32>} : memref<16x96xf32, #tpu.memory_space<vmem>>, vector<16x96xf32>,
    return
  }
  func.func @transform_0(%arg0: i32) -> (i32, i32) {
    %c0_i32 = arith.constant 0 : i32
    %c0_i32_0 = arith.constant 0 : i32
    return %arg0, %c0_i32 : i32, i32
  }
  func.func @transform_1(%arg0: i32) -> (i32, i32) {
    %c0_i32 = arith.constant 0 : i32
    %c0_i32_0 = arith.constant 0 : i32
    return %arg0, %c0_i32 : i32, i32
  }
  func.func @transform_2(%arg0: i32) -> (i32, i32) {
    %c0_i32 = arith.constant 0 : i32
    %c0_i32_0 = arith.constant 0 : i32
    %c0_i32_1 = arith.constant 0 : i32
    return %c0_i32, %c0_i32_0 : i32, i32
  }
  func.func @transform_3(%arg0: i32) -> (i32, i32) {
    %c0_i32 = arith.constant 0 : i32
    %c0_i32_0 = arith.constant 0 : i32
    %c0_i32_1 = arith.constant 0 : i32
    return %c0_i32, %c0_i32_0 : i32, i32
  }
  func.func @transform_4(%arg0: i32) -> (i32, i32) {
    %c0_i32 = arith.constant 0 : i32
    %c0_i32_0 = arith.constant 0 : i32
    %c0_i32_1 = arith.constant 0 : i32
    return %c0_i32, %c0_i32_0 : i32, i32
  }
  func.func @transform_5(%arg0: i32) -> (i32, i32) {
    %c0_i32 = arith.constant 0 : i32
    %c0_i32_0 = arith.constant 0 : i32
    %c0_i32_1 = arith.constant 0 : i32
    return %c0_i32, %c0_i32_0 : i32, i32
  }
  func.func @transform_6(%arg0: i32) -> (i32, i32) {
    %c0_i32 = arith.constant 0 : i32
    %c0_i32_0 = arith.constant 0 : i32
    %c0_i32_1 = arith.constant 0 : i32
    return %c0_i32, %c0_i32_0 : i32, i32
  }
  func.func @transform_7(%arg0: i32) -> (i32, i32) {
    %c0_i32 = arith.constant 0 : i32
    %c0_i32_0 = arith.constant 0 : i32
    %c0_i32_1 = arith.constant 0 : i32
    return %c0_i32, %c0_i32_0 : i32, i32
  }
  func.func @transform_8(%arg0: i32) -> (i32, i32) {
    %c0_i32 = arith.constant 0 : i32
    %c0_i32_0 = arith.constant 0 : i32
    return %arg0, %c0_i32 : i32, i32
  }
}

</mosaic_0001>

<llo_original>
// kernel: tpu_custom_call.1
$region0: #{tpu_custom_call.1}
  #allocation0 [shape = 'u32[]', space=smem, size = 0x4, offset = 0x4, fixed_abs, tag = 'smem constant byte address 0x4 - core index']
  #allocation1 [shape = 'u32[144,128]{1,0:T(1,128)}', space=vmem, size = 0x12000, scoped, tag = 'internal scratch']
  %s0 = inlined_call_operand.hbm [shape: f32[16,32], index: 0, kind: input, shape index: {}]
  %s1 = inlined_call_operand.hbm [shape: f32[16,32], index: 1, kind: input, shape index: {}]
  %s2 = inlined_call_operand.hbm [shape: f32[32,64], index: 2, kind: input, shape index: {}]
  %s3 = inlined_call_operand.hbm [shape: f32[1,64], index: 3, kind: input, shape index: {}]
  %s4 = inlined_call_operand.hbm [shape: f32[64,32], index: 4, kind: input, shape index: {}]
  %s5 = inlined_call_operand.hbm [shape: f32[1,32], index: 5, kind: input, shape index: {}]
  %s6 = inlined_call_operand.hbm [shape: f32[32,64], index: 6, kind: input, shape index: {}]
  %s7 = inlined_call_operand.hbm [shape: f32[1,64], index: 7, kind: input, shape index: {}]
  %s8 = inlined_call_operand.hbm [shape: f32[16,96], index: 8, kind: output, shape index: {}]
  %s9 = sld [smem:[#allocation0]]
  $region74: #{tpu_custom_call.1} parent=0
    _
  %s11 = ssub.s32 1, %s9
  %s12 = scalar_select 0, %s11, %s9
  $region1: #{tpu_custom_call.1} parent=0
    #allocation2 [shape = 'u8[8192]{0}', space=vmem, size = 0x2000, scoped, tag = 'input window, operand 0, single buffered']
    #allocation3 [shape = 's32[1]{0}', space=sflag, size = 0x4, scoped, tag = 'scoped memory for tpu_custom_call.1']
    #allocation4 [shape = 's32[1]{0}', space=sflag, size = 0x4, scoped, tag = 'scoped memory for tpu_custom_call.1']
    #allocation5 [shape = 'u8[8192]{0}', space=vmem, size = 0x2000, scoped, tag = 'input window, operand 1, single buffered']
    #allocation6 [shape = 's32[1]{0}', space=sflag, size = 0x4, scoped, tag = 'scoped memory for tpu_custom_call.1']
    #allocation7 [shape = 'u8[16384]{0}', space=vmem, size = 0x4000, scoped, tag = 'input window, operand 2, single buffered']
    #allocation8 [shape = 'u8[512]{0}', space=vmem, size = 0x400, scoped, tag = 'input window, operand 3, single buffered']
    #allocation9 [shape = 's32[1]{0}', space=sflag, size = 0x4, scoped, tag = 'scoped memory for tpu_custom_call.1']
    #allocation10 [shape = 'u8[32768]{0}', space=vmem, size = 0x8000, scoped, tag = 'input window, operand 4, single buffered']
    #allocation11 [shape = 'u8[512]{0}', space=vmem, size = 0x400, scoped, tag = 'input window, operand 5, single buffered']
    #allocation12 [shape = 's32[1]{0}', space=sflag, size = 0x4, scoped, tag = 'scoped memory for tpu_custom_call.1']
    #allocation13 [shape = 'u8[16384]{0}', space=vmem, size = 0x4000, scoped, tag = 'input window, operand 6, single buffered']
    #allocation14 [shape = 'u8[512]{0}', space=vmem, size = 0x400, scoped, tag = 'input window, operand 7, single buffered']
    #allocation15 [shape = 's32[1]{0}', space=sflag, size = 0x4, scoped, tag = 'scoped memory for tpu_custom_call.1']
    #allocation16 [shape = 'u8[8192]{0}', space=vmem, size = 0x2000, scoped, tag = 'output window, operand 0, single buffered']
    %13 = vsyncpa [#allocation3], 0
    %14 = vsyncpa [#allocation6], 0
    %15 = vsyncpa [#allocation9], 0
    %16 = vsyncpa [#allocation12], 0
    %17 = vsyncpa [#allocation15], 0
    %18 = vsyncpa [#allocation4], 0
    // Predicated region
    $region2: #{tpu_custom_call.1} parent=1 // pred_check
      _
    $region3: #{tpu_custom_call.1} parent=1 // pred_check_branch
      %20 = sbr.rel (0) target = $region5
    $region4: #{tpu_custom_call.1} parent=1 // pred_region
      %s22 = ssub.s32 256, 256
      %23 = vsyncadd [#allocation3], %s22
      %s24 = sshll.u32 [#allocation2], 4
      %s25 = int_to_ptr.vmem [resolvable:$true] %s24
      %30 = dma.hbm_to_vmem [thread:$0]  %s0, 256, %s25, [#allocation3], 128, 128, 8
    $region5: #{tpu_custom_call.1} parent=1 // pred_fallthru
      _
    // Predicated region
    $region6: #{tpu_custom_call.1} parent=1 // pred_check
      _
    $region7: #{tpu_custom_call.1} parent=1 // pred_check_branch
      %32 = sbr.rel (0) target = $region9
    $region8: #{tpu_custom_call.1} parent=1 // pred_region
      %s34 = ssub.s32 256, 256
      %35 = vsyncadd [#allocation6], %s34
      %s36 = sshll.u32 [#allocation5], 4
      %s37 = int_to_ptr.vmem [resolvable:$true] %s36
      %42 = dma.hbm_to_vmem [thread:$0]  %s1, 256, %s37, [#allocation6], 128, 128, 8
    $region9: #{tpu_custom_call.1} parent=1 // pred_fallthru
      _
    // Predicated region
    $region10: #{tpu_custom_call.1} parent=1 // pred_check
      _
    $region11: #{tpu_custom_call.1} parent=1 // pred_check_branch
      %44 = sbr.rel (0) target = $region13
    $region12: #{tpu_custom_call.1} parent=1 // pred_region
      %s46 = ssub.s32 512, 512
      %47 = vsyncadd [#allocation6], %s46
      %s48 = sshll.u32 [#allocation7], 4
      %s49 = int_to_ptr.vmem [resolvable:$true] %s48
      %54 = dma.hbm_to_vmem [thread:$0]  %s2, 512, %s49, [#allocation6], 128, 128, 8
    $region13: #{tpu_custom_call.1} parent=1 // pred_fallthru
      _
    // Predicated region
    $region14: #{tpu_custom_call.1} parent=1 // pred_check
      _
    $region15: #{tpu_custom_call.1} parent=1 // pred_check_branch
      %56 = sbr.rel (0) target = $region17
    $region16: #{tpu_custom_call.1} parent=1 // pred_region
      %s58 = ssub.s32 16, 16
      %59 = vsyncadd [#allocation9], %s58
      %s61 = sshll.u32 [#allocation8], 4
      %s62 = int_to_ptr.vmem [resolvable:$true] %s61
      %64 = dma.hbm_to_vmem [thread:$0]  %s3, 16, %s62, [#allocation9]
    $region17: #{tpu_custom_call.1} parent=1 // pred_fallthru
      _
    // Predicated region
    $region18: #{tpu_custom_call.1} parent=1 // pred_check
      _
    $region19: #{tpu_custom_call.1} parent=1 // pred_check_branch
      %66 = sbr.rel (0) target = $region21
    $region20: #{tpu_custom_call.1} parent=1 // pred_region
      %s68 = ssub.s32 1024, 1024
      %69 = vsyncadd [#allocation9], %s68
      %s70 = sshll.u32 [#allocation10], 4
      %s71 = int_to_ptr.vmem [resolvable:$true] %s70
      %76 = dma.hbm_to_vmem [thread:$0]  %s4, 1024, %s71, [#allocation9], 128, 128, 8
    $region21: #{tpu_custom_call.1} parent=1 // pred_fallthru
      _
    // Predicated region
    $region22: #{tpu_custom_call.1} parent=1 // pred_check
      _
    $region23: #{tpu_custom_call.1} parent=1 // pred_check_branch
      %78 = sbr.rel (0) target = $region25
    $region24: #{tpu_custom_call.1} parent=1 // pred_region
      %s80 = ssub.s32 16, 16
      %81 = vsyncadd [#allocation12], %s80
      %s83 = sshll.u32 [#allocation11], 4
      %s84 = int_to_ptr.vmem [resolvable:$true] %s83
      %86 = dma.hbm_to_vmem [thread:$0]  %s5, 16, %s84, [#allocation12]
    $region25: #{tpu_custom_call.1} parent=1 // pred_fallthru
      _
    // Predicated region
    $region26: #{tpu_custom_call.1} parent=1 // pred_check
      _
    $region27: #{tpu_custom_call.1} parent=1 // pred_check_branch
      %88 = sbr.rel (0) target = $region29
    $region28: #{tpu_custom_call.1} parent=1 // pred_region
      %s90 = ssub.s32 512, 512
      %91 = vsyncadd [#allocation12], %s90
      %s92 = sshll.u32 [#allocation13], 4
      %s93 = int_to_ptr.vmem [resolvable:$true] %s92
      %98 = dma.hbm_to_vmem [thread:$0]  %s6, 512, %s93, [#allocation12], 128, 128, 8
    $region29: #{tpu_custom_call.1} parent=1 // pred_fallthru
      _
    // Predicated region
    $region30: #{tpu_custom_call.1} parent=1 // pred_check
      _
    $region31: #{tpu_custom_call.1} parent=1 // pred_check_branch
      %100 = sbr.rel (0) target = $region33
    $region32: #{tpu_custom_call.1} parent=1 // pred_region
      %s102 = ssub.s32 16, 16
      %103 = vsyncadd [#allocation15], %s102
      %s105 = sshll.u32 [#allocation14], 4
      %s106 = int_to_ptr.vmem [resolvable:$true] %s105
      %108 = dma.hbm_to_vmem [thread:$0]  %s7, 16, %s106, [#allocation15]
    $region33: #{tpu_custom_call.1} parent=1 // pred_fallthru
      _
    // Predicated region
    $region34: #{tpu_custom_call.1} parent=1 // pred_check
      _
    $region35: #{tpu_custom_call.1} parent=1 // pred_check_branch
      %110 = sbr.rel (0) target = $region37
    $region36: #{tpu_custom_call.1} parent=1 // pred_region
      %111 = dma.done [#allocation3], 256
    $region37: #{tpu_custom_call.1} parent=1 // pred_fallthru
      _
    // Predicated region
    $region38: #{tpu_custom_call.1} parent=1 // pred_check
      _
    $region39: #{tpu_custom_call.1} parent=1 // pred_check_branch
      %113 = sbr.rel (0) target = $region41
    $region40: #{tpu_custom_call.1} parent=1 // pred_region
      %114 = dma.done [#allocation6], 256
    $region41: #{tpu_custom_call.1} parent=1 // pred_fallthru
      _
    // Predicated region
    $region42: #{tpu_custom_call.1} parent=1 // pred_check
      _
    $region43: #{tpu_custom_call.1} parent=1 // pred_check_branch
      %116 = sbr.rel (0) target = $region45
    $region44: #{tpu_custom_call.1} parent=1 // pred_region
      %117 = dma.done [#allocation6], 512
    $region45: #{tpu_custom_call.1} parent=1 // pred_fallthru
      _
    // Predicated region
    $region46: #{tpu_custom_call.1} parent=1 // pred_check
      _
    $region47: #{tpu_custom_call.1} parent=1 // pred_check_branch
      %119 = sbr.rel (0) target = $region49
    $region48: #{tpu_custom_call.1} parent=1 // pred_region
      %120 = dma.done [#allocation9], 16
    $region49: #{tpu_custom_call.1} parent=1 // pred_fallthru
      _
    // Predicated region
    $region50: #{tpu_custom_call.1} parent=1 // pred_check
      _
    $region51: #{tpu_custom_call.1} parent=1 // pred_check_branch
      %122 = sbr.rel (0) target = $region53
    $region52: #{tpu_custom_call.1} parent=1 // pred_region
      %123 = dma.done [#allocation9], 1024
    $region53: #{tpu_custom_call.1} parent=1 // pred_fallthru
      _
    // Predicated region
    $region54: #{tpu_custom_call.1} parent=1 // pred_check
      _
    $region55: #{tpu_custom_call.1} parent=1 // pred_check_branch
      %125 = sbr.rel (0) target = $region57
    $region56: #{tpu_custom_call.1} parent=1 // pred_region
      %126 = dma.done [#allocation12], 16
    $region57: #{tpu_custom_call.1} parent=1 // pred_fallthru
      _
    // Predicated region
    $region58: #{tpu_custom_call.1} parent=1 // pred_check
      _
    $region59: #{tpu_custom_call.1} parent=1 // pred_check_branch
      %128 = sbr.rel (0) target = $region61
    $region60: #{tpu_custom_call.1} parent=1 // pred_region
      %129 = dma.done [#allocation12], 512
    $region61: #{tpu_custom_call.1} parent=1 // pred_fallthru
      _
    // Predicated region
    $region62: #{tpu_custom_call.1} parent=1 // pred_check
      _
    $region63: #{tpu_custom_call.1} parent=1 // pred_check_branch
      %131 = sbr.rel (0) target = $region65
    $region64: #{tpu_custom_call.1} parent=1 // pred_region
      %132 = dma.done [#allocation15], 16
    $region65: #{tpu_custom_call.1} parent=1 // pred_fallthru
      _
    %v133 = vld [vmem:[#allocation2] sm:$0xff]
    %v134 = vld [vmem:[#allocation2 + $0x8] sm:$0xff]
    %v135 = vld [vmem:[#allocation7] sm:$0xff]
    %v136 = vld [vmem:[#allocation7 + $0x8] sm:$0xff]
    %v137 = vld [vmem:[#allocation7 + $0x10] sm:$0xff]
    %v138 = vld [vmem:[#allocation7 + $0x18] sm:$0xff]
    %v139 = vld [vmem:[#allocation8] sm:$0x1]
    %v141 = vlaneseq
    %v142 = vshrl.u32 %v141, 7
    %v143 = vsub.s32 0, %v142
    %v144 = vrot.slane %v139, %v143
    %vm146 = vcmask 261120
    %v148 = vsel %vm146, %v133, 0
    %v151 = vsel %vm146, %v134, 0
    %153 = vmatprep.subr.mxu0 0.0
    %154 = vmatpush1.msra.mxu0 %v135
    %155 = vmatprep.subr.mxu0 0.0
    %156 = vmatpush1.msra.mxu0 %v136
    %157 = vmatprep.subr.mxu0 0.0
    %158 = vmatpush1.msra.mxu0 %v137
    %159 = vmatprep.subr.mxu0 0.0
    %160 = vmatpush1.msra.mxu0 %v138
    %161 = vmatprep.subr.mxu0 0.0
    %162 = vmatpush1.msra.mxu0 0.0
    %163 = vmatprep.subr.mxu0 0.0
    %164 = vmatpush1.msra.mxu0 0.0
    %165 = vmatprep.subr.mxu0 0.0
    %166 = vmatpush1.msra.mxu0 0.0
    %167 = vmatprep.subr.mxu0 0.0
    %168 = vmatpush1.msra.mxu0 0.0
    %169 = vmatprep.subr.mxu0 0.0
    %170 = vmatpush1.msra.mxu0 0.0
    %171 = vmatprep.subr.mxu0 0.0
    %172 = vmatpush1.msra.mxu0 0.0
    %173 = vmatprep.subr.mxu0 0.0
    %174 = vmatpush1.msra.mxu0 0.0
    %175 = vmatprep.subr.mxu0 0.0
    %176 = vmatpush1.msra.mxu0 0.0
    %177 = vmatprep.subr.mxu0 0.0
    %178 = vmatpush1.msra.mxu0 0.0
    %179 = vmatprep.subr.mxu0 0.0
    %180 = vmatpush1.msra.mxu0 0.0
    %181 = vmatprep.subr.mxu0 0.0
    %182 = vmatpush1.msra.mxu0 0.0
    %183 = vmatprep.subr.mxu0 0.0
    %184 = vmatpush1.msra.mxu0 0.0
    %185 = vmatprep.subr.mxu0 0.0
    %186 = vmatpush1.msra.mxu0 0.0
    %187 = vmatprep.subr.mxu0 0.0
    %188 = vmatpush1.msra.mxu0 0.0
    %189 = vmatprep.subr.mxu0 0.0
    %190 = vmatpush1.msra.mxu0 0.0
    %191 = vmatprep.subr.mxu0 0.0
    %192 = vmatpush1.msra.mxu0 0.0
    %193 = vmatprep.subr.mxu0 0.0
    %194 = vmatpush1.msra.mxu0 0.0
    %195 = vmatprep.subr.mxu0 0.0
    %196 = vmatpush1.msra.mxu0 0.0
    %197 = vmatprep.subr.mxu0 0.0
    %198 = vmatpush1.msra.mxu0 0.0
    %199 = vmatprep.subr.mxu0 0.0
    %200 = vmatpush1.msra.mxu0 0.0
    %201 = vmatprep.subr.mxu0 0.0
    %202 = vmatpush1.msra.mxu0 0.0
    %203 = vmatprep.subr.mxu0 0.0
    %204 = vmatpush1.msra.mxu0 0.0
    %205 = vmatprep.subr.mxu0 0.0
    %206 = vmatpush1.msra.mxu0 0.0
    %207 = vmatprep.subr.mxu0 0.0
    %208 = vmatpush1.msra.mxu0 0.0
    %209 = vmatprep.subr.mxu0 0.0
    %210 = vmatpush1.msra.mxu0 0.0
    %211 = vmatprep.subr.mxu0 0.0
    %212 = vmatpush1.msra.mxu0 0.0
    %213 = vmatprep.subr.mxu0 0.0
    %214 = vmatpush1.msra.mxu0 0.0
    %215 = vmatprep.subr.mxu0 0.0
    %216 = vmatpush1.msra.mxu0 0.0
    %217 = vmatprep.mubr.f32.mxu0 0.0
    %218 = vmatmul.mubr.f32.gmra.mrb[0].mxu0 %v148
    %v219 = vpop.f32.mrb[0].mxu0
    %v220 = vadd.f32 %v144, %v219
    %v221 = vpop.f32.mrb[0].mxu0
    %222 = vmatprep.mubr.f32.mxu0 0.0
    %223 = vmatmul.mubr.f32.gmra.mrb[0].mxu0 %v151
    %v224 = vpop.f32.mrb[0].mxu0
    %v225 = vadd.f32 %v144, %v224
    %v226 = vpop.f32.mrb[0].mxu0
    %227 = vdwg.mxu0
    %v228 = vld [vmem:[#allocation10] sm:$0xff]
    %v229 = vld [vmem:[#allocation10 + $0x8] sm:$0xff]
    %v230 = vld [vmem:[#allocation10 + $0x10] sm:$0xff]
    %v231 = vld [vmem:[#allocation10 + $0x18] sm:$0xff]
    %v232 = vld [vmem:[#allocation10 + $0x20] sm:$0xff]
    %v233 = vld [vmem:[#allocation10 + $0x28] sm:$0xff]
    %v234 = vld [vmem:[#allocation10 + $0x30] sm:$0xff]
    %v235 = vld [vmem:[#allocation10 + $0x38] sm:$0xff]
    %v236 = vld [vmem:[#allocation11] sm:$0x1]
    %v238 = vlaneseq
    %v239 = vshrl.u32 %v238, 7
    %v240 = vsub.s32 0, %v239
    %v241 = vrot.slane %v236, %v240
    %vm243 = vcmask 523264
    %v245 = vsel %vm243, %v220, 0
    %v248 = vsel %vm243, %v225, 0
    %250 = vmatprep.subr.mxu0 0.0
    %251 = vmatpush1.msra.mxu0 %v228
    %252 = vmatprep.subr.mxu0 0.0
    %253 = vmatpush1.msra.mxu0 %v229
    %254 = vmatprep.subr.mxu0 0.0
    %255 = vmatpush1.msra.mxu0 %v230
    %256 = vmatprep.subr.mxu0 0.0
    %257 = vmatpush1.msra.mxu0 %v231
    %258 = vmatprep.subr.mxu0 0.0
    %259 = vmatpush1.msra.mxu0 %v232
    %260 = vmatprep.subr.mxu0 0.0
    %261 = vmatpush1.msra.mxu0 %v233
    %262 = vmatprep.subr.mxu0 0.0
    %263 = vmatpush1.msra.mxu0 %v234
    %264 = vmatprep.subr.mxu0 0.0
    %265 = vmatpush1.msra.mxu0 %v235
    %266 = vmatprep.subr.mxu0 0.0
    %267 = vmatpush1.msra.mxu0 0.0
    %268 = vmatprep.subr.mxu0 0.0
    %269 = vmatpush1.msra.mxu0 0.0
    %270 = vmatprep.subr.mxu0 0.0
    %271 = vmatpush1.msra.mxu0 0.0
    %272 = vmatprep.subr.mxu0 0.0
    %273 = vmatpush1.msra.mxu0 0.0
    %274 = vmatprep.subr.mxu0 0.0
    %275 = vmatpush1.msra.mxu0 0.0
    %276 = vmatprep.subr.mxu0 0.0
    %277 = vmatpush1.msra.mxu0 0.0
    %278 = vmatprep.subr.mxu0 0.0
    %279 = vmatpush1.msra.mxu0 0.0
    %280 = vmatprep.subr.mxu0 0.0
    %281 = vmatpush1.msra.mxu0 0.0
    %282 = vmatprep.subr.mxu0 0.0
    %283 = vmatpush1.msra.mxu0 0.0
    %284 = vmatprep.subr.mxu0 0.0
    %285 = vmatpush1.msra.mxu0 0.0
    %286 = vmatprep.subr.mxu0 0.0
    %287 = vmatpush1.msra.mxu0 0.0
    %288 = vmatprep.subr.mxu0 0.0
    %289 = vmatpush1.msra.mxu0 0.0
    %290 = vmatprep.subr.mxu0 0.0
    %291 = vmatpush1.msra.mxu0 0.0
    %292 = vmatprep.subr.mxu0 0.0
    %293 = vmatpush1.msra.mxu0 0.0
    %294 = vmatprep.subr.mxu0 0.0
    %295 = vmatpush1.msra.mxu0 0.0
    %296 = vmatprep.subr.mxu0 0.0
    %297 = vmatpush1.msra.mxu0 0.0
    %298 = vmatprep.subr.mxu0 0.0
    %299 = vmatpush1.msra.mxu0 0.0
    %300 = vmatprep.subr.mxu0 0.0
    %301 = vmatpush1.msra.mxu0 0.0
    %302 = vmatprep.subr.mxu0 0.0
    %303 = vmatpush1.msra.mxu0 0.0
    %304 = vmatprep.subr.mxu0 0.0
    %305 = vmatpush1.msra.mxu0 0.0
    %306 = vmatprep.subr.mxu0 0.0
    %307 = vmatpush1.msra.mxu0 0.0
    %308 = vmatprep.subr.mxu0 0.0
    %309 = vmatpush1.msra.mxu0 0.0
    %310 = vmatprep.subr.mxu0 0.0
    %311 = vmatpush1.msra.mxu0 0.0
    %312 = vmatprep.subr.mxu0 0.0
    %313 = vmatpush1.msra.mxu0 0.0
    %314 = vmatprep.mubr.f32.mxu0 0.0
    %315 = vmatmul.mubr.f32.gmra.mrb[0].mxu0 %v245
    %v316 = vpop.f32.mrb[0].mxu0
    %v317 = vadd.f32 %v241, %v316
    %v318 = vpop.f32.mrb[0].mxu0
    %319 = vmatprep.mubr.f32.mxu0 0.0
    %320 = vmatmul.mubr.f32.gmra.mrb[0].mxu0 %v248
    %v321 = vpop.f32.mrb[0].mxu0
    %v322 = vadd.f32 %v241, %v321
    %v323 = vpop.f32.mrb[0].mxu0
    %324 = vdwg.mxu0
    %v325 = vld [vmem:[#allocation13] sm:$0xff]
    %v326 = vld [vmem:[#allocation13 + $0x8] sm:$0xff]
    %v327 = vld [vmem:[#allocation13 + $0x10] sm:$0xff]
    %v328 = vld [vmem:[#allocation13 + $0x18] sm:$0xff]
    %v329 = vld [vmem:[#allocation14] sm:$0x1]
    %v331 = vlaneseq
    %v332 = vshrl.u32 %v331, 7
    %v333 = vsub.s32 0, %v332
    %v334 = vrot.slane %v329, %v333
    %v337 = vsel %vm146, %v317, 0
    %v340 = vsel %vm146, %v322, 0
    %342 = vmatprep.subr.mxu0 0.0
    %343 = vmatpush1.msra.mxu0 %v325
    %344 = vmatprep.subr.mxu0 0.0
    %345 = vmatpush1.msra.mxu0 %v326
    %346 = vmatprep.subr.mxu0 0.0
    %347 = vmatpush1.msra.mxu0 %v327
    %348 = vmatprep.subr.mxu0 0.0
    %349 = vmatpush1.msra.mxu0 %v328
    %350 = vmatprep.subr.mxu0 0.0
    %351 = vmatpush1.msra.mxu0 0.0
    %352 = vmatprep.subr.mxu0 0.0
    %353 = vmatpush1.msra.mxu0 0.0
    %354 = vmatprep.subr.mxu0 0.0
    %355 = vmatpush1.msra.mxu0 0.0
    %356 = vmatprep.subr.mxu0 0.0
    %357 = vmatpush1.msra.mxu0 0.0
    %358 = vmatprep.subr.mxu0 0.0
    %359 = vmatpush1.msra.mxu0 0.0
    %360 = vmatprep.subr.mxu0 0.0
    %361 = vmatpush1.msra.mxu0 0.0
    %362 = vmatprep.subr.mxu0 0.0
    %363 = vmatpush1.msra.mxu0 0.0
    %364 = vmatprep.subr.mxu0 0.0
    %365 = vmatpush1.msra.mxu0 0.0
    %366 = vmatprep.subr.mxu0 0.0
    %367 = vmatpush1.msra.mxu0 0.0
    %368 = vmatprep.subr.mxu0 0.0
    %369 = vmatpush1.msra.mxu0 0.0
    %370 = vmatprep.subr.mxu0 0.0
    %371 = vmatpush1.msra.mxu0 0.0
    %372 = vmatprep.subr.mxu0 0.0
    %373 = vmatpush1.msra.mxu0 0.0
    %374 = vmatprep.subr.mxu0 0.0
    %375 = vmatpush1.msra.mxu0 0.0
    %376 = vmatprep.subr.mxu0 0.0
    %377 = vmatpush1.msra.mxu0 0.0
    %378 = vmatprep.subr.mxu0 0.0
    %379 = vmatpush1.msra.mxu0 0.0
    %380 = vmatprep.subr.mxu0 0.0
    %381 = vmatpush1.msra.mxu0 0.0
    %382 = vmatprep.subr.mxu0 0.0
    %383 = vmatpush1.msra.mxu0 0.0
    %384 = vmatprep.subr.mxu0 0.0
    %385 = vmatpush1.msra.mxu0 0.0
    %386 = vmatprep.subr.mxu0 0.0
    %387 = vmatpush1.msra.mxu0 0.0
    %388 = vmatprep.subr.mxu0 0.0
    %389 = vmatpush1.msra.mxu0 0.0
    %390 = vmatprep.subr.mxu0 0.0
    %391 = vmatpush1.msra.mxu0 0.0
    %392 = vmatprep.subr.mxu0 0.0
    %393 = vmatpush1.msra.mxu0 0.0
    %394 = vmatprep.subr.mxu0 0.0
    %395 = vmatpush1.msra.mxu0 0.0
    %396 = vmatprep.subr.mxu0 0.0
    %397 = vmatpush1.msra.mxu0 0.0
    %398 = vmatprep.subr.mxu0 0.0
    %399 = vmatpush1.msra.mxu0 0.0
    %400 = vmatprep.subr.mxu0 0.0
    %401 = vmatpush1.msra.mxu0 0.0
    %402 = vmatprep.subr.mxu0 0.0
    %403 = vmatpush1.msra.mxu0 0.0
    %404 = vmatprep.subr.mxu0 0.0
    %405 = vmatpush1.msra.mxu0 0.0
    %406 = vmatprep.mubr.f32.mxu0 0.0
    %407 = vmatmul.mubr.f32.gmra.mrb[0].mxu0 %v337
    %v408 = vpop.f32.mrb[0].mxu0
    %v409 = vadd.f32 %v334, %v408
    %v410 = vpop.f32.mrb[0].mxu0
    %411 = vmatprep.mubr.f32.mxu0 0.0
    %412 = vmatmul.mubr.f32.gmra.mrb[0].mxu0 %v340
    %v413 = vpop.f32.mrb[0].mxu0
    %v414 = vadd.f32 %v334, %v413
    %v415 = vpop.f32.mrb[0].mxu0
    %416 = vdwg.mxu0
    %v417 = vld [vmem:[#allocation5] sm:$0xff]
    %v418 = vld [vmem:[#allocation5 + $0x8] sm:$0xff]
    %v419 = vmul.f32 %v409, 0.5
    %v420 = vmul.f32 %v414, 0.5
    %v421 = vmul.f32 %v419, 1.442695
    %v422 = vpow.pop %v421
    %v423 = vmul.f32 %v420, 1.442695
    %v424 = vpow.pop %v423
    %427 = vrot.lane.b32.xlu0 %v422, 96
    %v428 = vpop.permute.xlu0 %427
    %429 = vrot.lane.b32.xlu0 %v424, 96
    %v430 = vpop.permute.xlu0 %429
    %v433 = vmul.f32 %v417, %v428
    %v434 = vmul.f32 %v418, %v430
    %v435 = vadd.f32 %v409, %v433
    %v436 = vadd.f32 %v414, %v434
    %439 = vrot.lane.b32.xlu0 %v435, 64
    %v440 = vpop.permute.xlu0 %439
    %441 = vrot.lane.b32.xlu0 %v436, 64
    %v442 = vpop.permute.xlu0 %441
    %v445 = vsel %vm243, %v409, %v440
    %v446 = vsel %vm243, %v414, %v442
    %vm447 = vcmask 785408
    %448 = vst.msk [vmem:[#allocation16] sm:$0xff] %vm447, %v445
    %449 = vst.msk [vmem:[#allocation16 + $0x8] sm:$0xff] %vm447, %v446
    // Predicated region
    $region66: #{tpu_custom_call.1} parent=1 // pred_check
      _
    $region67: #{tpu_custom_call.1} parent=1 // pred_check_branch
      %451 = sbr.rel (0) target = $region69
    $region68: #{tpu_custom_call.1} parent=1 // pred_region
      %s453 = ssub.s32 256, 256
      %454 = vsyncadd [#allocation4], %s453
      %s455 = sshll.u32 [#allocation16], 4
      %s456 = int_to_ptr.vmem [resolvable:$true] %s455
      %461 = dma.vmem_to_hbm [thread:$0]  %s456, 256, %s8, [#allocation4], 128, 128, 8
    $region69: #{tpu_custom_call.1} parent=1 // pred_fallthru
      _
    // Predicated region
    $region70: #{tpu_custom_call.1} parent=1 // pred_check
      _
    $region71: #{tpu_custom_call.1} parent=1 // pred_check_branch
      %463 = sbr.rel (0) target = $region73
    $region72: #{tpu_custom_call.1} parent=1 // pred_region
      %464 = dma.done [#allocation4], 256
    $region73: #{tpu_custom_call.1} parent=1 // pred_fallthru
      _
    %465 = vsyncpa [#allocation3], 1
    %466 = vsyncpa [#allocation6], 1
    %467 = vsyncpa [#allocation9], 1
    %468 = vsyncpa [#allocation12], 1
    %469 = vsyncpa [#allocation15], 1
    %470 = vsyncpa [#allocation4], 1

</llo_original>
